<compile_context>
chip_gen: v7x
topology: tpu7x:2x2x1
jax: 0.10.0
libtpu: 0.0.40
codegen_flags: <defaults>
</compile_context>

<pallas_src>
import functools

import jax
import jax.numpy as jnp
from jax.experimental import pallas as pl
from jax.experimental.pallas import tpu as pltpu


def _sat_attention_kernel(f1_ref, dec_ref, wf_ref, bf_ref, wd_ref, bd_ref,
                          alpha_ref, ctx_ref, *, B, NA, C, F_out):
    # f1_ref:  (B*C, HW)    dec_ref: (B*NA, D_dec)
    # wf_ref:  (HW, F_out)  bf_ref:  (1, F_out)
    # wd_ref:  (D_dec, C)   bd_ref:  (1, C)
    # alpha_ref: (NA, C)    ctx_ref: (B*NA, F_out)

    # Batched linear layers: one MXU pass each for the whole batch.
    lin_feat = jnp.dot(f1_ref[...], wf_ref[...],
                       preferred_element_type=jnp.float32) + bf_ref[...]   # (B*C, F_out)
    logits = jnp.dot(dec_ref[...], wd_ref[...],
                     preferred_element_type=jnp.float32) + bd_ref[...]     # (B*NA, C)

    # Row softmax over the last dim (all elementwise math kept in f32).
    m = jnp.max(logits, axis=-1, keepdims=True)
    e = jnp.exp(logits - m)
    denom = jnp.sum(e, axis=-1, keepdims=True)
    alpha = e * pl.reciprocal(denom, approx=True)                          # (B*NA, C)

    # The module only returns the last batch element's alpha.
    alpha_ref[...] = alpha[(B - 1) * NA:, :].astype(alpha_ref.dtype)

    # Per-batch context vectors: tiny MXU passes, statically unrolled over B.
    for b in range(B):
        a_b = alpha[b * NA:(b + 1) * NA, :]       # (NA, C)
        f_b = lin_feat[b * C:(b + 1) * C, :]      # (C, F_out)
        ctx_ref[b * NA:(b + 1) * NA, :] = jnp.dot(
            a_b, f_b, preferred_element_type=jnp.float32).astype(ctx_ref.dtype)


def sat_attention_forward(feature_1, feature_decoder, params, num_agents):
    """
    feature_1:       (B, C, H, W)       float32
    feature_decoder: (1, NA*B, D_dec)   float32
    params: dict with w_f (HW, F_out), b_f (F_out,), w_d (D_dec, C), b_d (C,)
            (weights stored transposed as (in, out) so the kernel does x @ W + b)
    Returns (alpha, list_context_vector) matching the PyTorch module:
        alpha:               (NA, C)        -- from the last batch element
        list_context_vector: (B*NA, F_out)
    """
    B, C, H, W = feature_1.shape
    HW = H * W
    NA = num_agents
    total = feature_decoder.shape[1]
    assert total % NA == 0
    batch_size = total // NA
    assert batch_size == B
    D_dec = feature_decoder.shape[2]
    F_out = params["w_f"].shape[1]
    assert params["w_d"].shape[1] == C, "linear_decoder.out_features must equal C"

    # Flatten so each linear layer is a single full-batch matmul inside the kernel.
    f1_flat = feature_1.reshape(B * C, HW)            # rows i*C:(i+1)*C == batch i
    dec_flat = feature_decoder.reshape(B * NA, D_dec)  # rows i*NA:(i+1)*NA == batch i
    bf = params["b_f"].reshape(1, F_out)
    bd = params["b_d"].reshape(1, C)

    kernel = functools.partial(_sat_attention_kernel, B=B, NA=NA, C=C, F_out=F_out)

    # Single invocation (no grid): everything fits trivially in VMEM, weights are
    # loaded once, and there is no per-grid-step pipeline overhead.
    alpha_last, ctx = pl.pallas_call(
        kernel,
        out_shape=(
            jax.ShapeDtypeStruct((NA, C), jnp.float32),
            jax.ShapeDtypeStruct((B * NA, F_out), jnp.float32),
        ),
        in_specs=[pl.BlockSpec(memory_space=pltpu.MemorySpace.VMEM)] * 6,
        out_specs=[
            pl.BlockSpec(memory_space=pltpu.MemorySpace.VMEM),
            pl.BlockSpec(memory_space=pltpu.MemorySpace.VMEM),
        ],
    )(f1_flat, dec_flat, params["w_f"], bf, params["w_d"], bd)

    return alpha_last, ctx


def _reference(feature_1, feature_decoder, params, num_agents):
    """Pure-JAX reference mirroring the PyTorch loop."""
    B, C, H, W = feature_1.shape
    NA = num_agents
    D_dec = feature_decoder.shape[2]
    ctx_list = []
    alpha = None
    for i in range(B):
        f1_i = feature_1[i].reshape(C, H * W)
        lin_feat = f1_i @ params["w_f"] + params["b_f"]
        dec_i = feature_decoder[:, NA * i:NA * (i + 1), :].reshape(NA, D_dec)
        lin_dec = dec_i @ params["w_d"] + params["b_d"]
        alpha = jax.nn.softmax(lin_dec, axis=1)
        ctx_list.append(alpha @ lin_feat)
    return alpha, jnp.concatenate(ctx_list, axis=0)


if __name__ == "__main__":
    # Small shapes consistent with the module (4-D visual-extractor branch):
    #   feature_1: (batch=2, C=4, H=16, W=16)  -> HW = 256
    #   feature_decoder: (1, num_agents*batch, D_dec=32), num_agents = 8
    #   linear_feature: 256 -> 32 ; linear_decoder: 32 -> 4 (= C, required by matmul)
    B, C, H, W = 2, 4, 16, 16
    NA, D_dec, F_out = 8, 32, 32
    HW = H * W

    key = jax.random.PRNGKey(0)
    k1, k2, k3, k4, k5, k6 = jax.random.split(key, 6)

    feature_1 = jax.random.normal(k1, (B, C, H, W), dtype=jnp.float32)
    feature_decoder = jax.random.normal(k2, (1, NA * B, D_dec), dtype=jnp.float32)

    params = {
        "w_f": (jax.random.normal(k3, (HW, F_out), dtype=jnp.float32)
                * (1.0 / jnp.sqrt(HW))),
        "b_f": jax.random.normal(k4, (F_out,), dtype=jnp.float32) * 0.01,
        "w_d": (jax.random.normal(k5, (D_dec, C), dtype=jnp.float32)
                * (1.0 / jnp.sqrt(D_dec))),
        "b_d": jax.random.normal(k6, (C,), dtype=jnp.float32) * 0.01,
    }

    alpha, ctx = sat_attention_forward(feature_1, feature_decoder, params, NA)
    jax.block_until_ready((alpha, ctx))

    alpha_ref, ctx_ref = _reference(feature_1, feature_decoder, params, NA)
    assert alpha.shape == (NA, C)
    assert ctx.shape == (B * NA, F_out)
    # Tolerances widened slightly to accommodate the EUP approximate reciprocal
    # in the softmax normalizer (relative error ~2^-12).
    assert jnp.allclose(alpha, alpha_ref, atol=2e-3, rtol=2e-3)
    assert jnp.allclose(ctx, ctx_ref, atol=5e-3, rtol=5e-3)

    print("KERNEL_OK")
</pallas_src>

<mosaic_0001>
module attributes {stable_mosaic.version = 11 : i64} {
  func.func @_sat_attention_kernel(%arg0: memref<8x256xf32, #tpu.memory_space<vmem>>, %arg1: memref<16x32xf32, #tpu.memory_space<vmem>>, %arg2: memref<256x32xf32, #tpu.memory_space<vmem>>, %arg3: memref<1x32xf32, #tpu.memory_space<vmem>>, %arg4: memref<32x4xf32, #tpu.memory_space<vmem>>, %arg5: memref<1x4xf32, #tpu.memory_space<vmem>>, %arg6: memref<8x4xf32, #tpu.memory_space<vmem>>, %arg7: memref<16x32xf32, #tpu.memory_space<vmem>>) attributes {dimension_semantics = [], scalar_prefetch = 0 : i64, scratch_operands = 0 : i64, tpu.core_type = #tpu.core_type<tc>} {
    %c0 = arith.constant 0 : index
    %c0_0 = arith.constant 0 : index
    %0 = vector.load %arg0[%c0, %c0_0] : memref<8x256xf32, #tpu.memory_space<vmem>>, vector<8x256xf32>
    %c0_1 = arith.constant 0 : index
    %c0_2 = arith.constant 0 : index
    %1 = vector.load %arg2[%c0_1, %c0_2] : memref<256x32xf32, #tpu.memory_space<vmem>>, vector<256x32xf32>
    %cst = arith.constant dense<0.000000e+00> : vector<8x32xf32>
    %2 = tpu.matmul %0, %1, %cst {dimension_numbers = #tpu.dot_dimension_numbers<[1], [0], [0], [1], [0, 0, 1, 1], [], []>} : vector<8x256xf32>, vector<256x32xf32>, vector<8x32xf32> -> vector<8x32xf32>
    %c0_3 = arith.constant 0 : index
    %c0_4 = arith.constant 0 : index
    %3 = vector.load %arg3[%c0_3, %c0_4] : memref<1x32xf32, #tpu.memory_space<vmem>>, vector<1x32xf32>
    %4 = vector.broadcast %3 : vector<1x32xf32> to vector<8x32xf32>
    %5 = arith.addf %2, %4 : vector<8x32xf32>
    %c0_5 = arith.constant 0 : index
    %c0_6 = arith.constant 0 : index
    %6 = vector.load %arg1[%c0_5, %c0_6] : memref<16x32xf32, #tpu.memory_space<vmem>>, vector<16x32xf32>
    %c0_7 = arith.constant 0 : index
    %c0_8 = arith.constant 0 : index
    %7 = vector.load %arg4[%c0_7, %c0_8] : memref<32x4xf32, #tpu.memory_space<vmem>>, vector<32x4xf32>
    %cst_9 = arith.constant dense<0.000000e+00> : vector<16x4xf32>
    %8 = tpu.matmul %6, %7, %cst_9 {dimension_numbers = #tpu.dot_dimension_numbers<[1], [0], [0], [1], [0, 0, 1, 1], [], []>} : vector<16x32xf32>, vector<32x4xf32>, vector<16x4xf32> -> vector<16x4xf32>
    %c0_10 = arith.constant 0 : index
    %c0_11 = arith.constant 0 : index
    %9 = vector.load %arg5[%c0_10, %c0_11] : memref<1x4xf32, #tpu.memory_space<vmem>>, vector<1x4xf32>
    %10 = vector.broadcast %9 : vector<1x4xf32> to vector<16x4xf32>
    %11 = arith.addf %8, %10 : vector<16x4xf32>
    %cst_12 = arith.constant dense<0xFF800000> : vector<16xf32>
    %12 = vector.multi_reduction <maximumf>, %11, %cst_12 [1] : vector<16x4xf32> to vector<16xf32>
    %13 = vector.shape_cast %12 : vector<16xf32> to vector<16x1xf32>
    %14 = vector.broadcast %13 : vector<16x1xf32> to vector<16x4xf32>
    %15 = arith.subf %11, %14 : vector<16x4xf32>
    %16 = math.exp %15 : vector<16x4xf32>
    %cst_13 = arith.constant dense<0.000000e+00> : vector<16xf32>
    %17 = vector.multi_reduction <add>, %16, %cst_13 [1] : vector<16x4xf32> to vector<16xf32>
    %18 = vector.shape_cast %17 : vector<16xf32> to vector<16x1xf32>
    %19 = tpu.reciprocal %18 {approx = true} : vector<16x1xf32> -> vector<16x1xf32>
    %20 = vector.broadcast %19 : vector<16x1xf32> to vector<16x4xf32>
    %21 = arith.mulf %16, %20 : vector<16x4xf32>
    %22 = vector.extract_strided_slice %21 {offsets = [8, 0], sizes = [8, 4], strides = [1, 1]} : vector<16x4xf32> to vector<8x4xf32>
    %c0_14 = arith.constant 0 : index
    %c0_15 = arith.constant 0 : index
    %23 = vector.load %arg6[%c0_14, %c0_15] : memref<8x4xf32, #tpu.memory_space<vmem>>, vector<8x4xf32>
    tpu.vector_store %arg6[%c0_14, %c0_15], %22 {strides = array<i32>} : memref<8x4xf32, #tpu.memory_space<vmem>>, vector<8x4xf32>,
    %24 = vector.extract_strided_slice %21 {offsets = [0, 0], sizes = [8, 4], strides = [1, 1]} : vector<16x4xf32> to vector<8x4xf32>
    %25 = vector.extract_strided_slice %5 {offsets = [0, 0], sizes = [4, 32], strides = [1, 1]} : vector<8x32xf32> to vector<4x32xf32>
    %cst_16 = arith.constant dense<0.000000e+00> : vector<8x32xf32>
    %26 = tpu.matmul %24, %25, %cst_16 {dimension_numbers = #tpu.dot_dimension_numbers<[1], [0], [0], [1], [0, 0, 1, 1], [], []>} : vector<8x4xf32>, vector<4x32xf32>, vector<8x32xf32> -> vector<8x32xf32>
    %c0_17 = arith.constant 0 : index
    %c0_18 = arith.constant 0 : index
    %27 = vector.load %arg7[%c0_17, %c0_18] : memref<16x32xf32, #tpu.memory_space<vmem>>, vector<8x32xf32>
    tpu.vector_store %arg7[%c0_17, %c0_18], %26 {strides = array<i32>} : memref<16x32xf32, #tpu.memory_space<vmem>>, vector<8x32xf32>,
    %28 = vector.extract_strided_slice %21 {offsets = [8, 0], sizes = [8, 4], strides = [1, 1]} : vector<16x4xf32> to vector<8x4xf32>
    %29 = vector.extract_strided_slice %5 {offsets = [4, 0], sizes = [4, 32], strides = [1, 1]} : vector<8x32xf32> to vector<4x32xf32>
    %cst_19 = arith.constant dense<0.000000e+00> : vector<8x32xf32>
    %30 = tpu.matmul %28, %29, %cst_19 {dimension_numbers = #tpu.dot_dimension_numbers<[1], [0], [0], [1], [0, 0, 1, 1], [], []>} : vector<8x4xf32>, vector<4x32xf32>, vector<8x32xf32> -> vector<8x32xf32>
    %c8 = arith.constant 8 : index
    %c0_20 = arith.constant 0 : index
    %31 = vector.load %arg7[%c8, %c0_20] : memref<16x32xf32, #tpu.memory_space<vmem>>, vector<8x32xf32>
    tpu.vector_store %arg7[%c8, %c0_20], %30 {strides = array<i32>} : memref<16x32xf32, #tpu.memory_space<vmem>>, vector<8x32xf32>,
    return
  }
}

</mosaic_0001>

<llo_original>
// kernel: tpu_custom_call.1
$region0: #{tpu_custom_call.1}
  #allocation0 [shape = 'u32[]', space=smem, size = 0x4, offset = 0x4, fixed_abs, tag = 'smem constant byte address 0x4 - core index']
  #allocation1 [shape = 'u32[144,128]{1,0:T(1,128)}', space=vmem, size = 0x12000, scoped, tag = 'internal scratch']
  %s0 = inlined_call_operand.vmem [shape: f32[8,256], index: 0, kind: input, shape index: {}]
  %s1 = inlined_call_operand.vmem [shape: f32[16,32], index: 1, kind: input, shape index: {}]
  %s2 = inlined_call_operand.vmem [shape: f32[256,32], index: 2, kind: input, shape index: {}]
  %s3 = inlined_call_operand.vmem [shape: f32[1,32], index: 3, kind: input, shape index: {}]
  %s4 = inlined_call_operand.vmem [shape: f32[32,4], index: 4, kind: input, shape index: {}]
  %s5 = inlined_call_operand.vmem [shape: f32[1,4], index: 5, kind: input, shape index: {}]
  %s6 = inlined_call_operand.vmem [shape: f32[8,4], index: 6, kind: output, shape index: {0}]
  %s7 = inlined_call_operand.hbm [shape: f32[16,32], index: 7, kind: output, shape index: {1}]
  %8 = xla_tuple %s6, %s7
  %s9 = sld [smem:[#allocation0]]
  $region42: #{tpu_custom_call.1} parent=0
    _
  %s11 = ssub.s32 1, %s9
  %s12 = scalar_select 0, %s11, %s9
  $region1: #{tpu_custom_call.1} parent=0
    #allocation2 [shape = 'u8[8192]{0}', space=vmem, size = 0x2000, scoped, tag = 'output window, operand 1, single buffered']
    #allocation3 [shape = 's32[1]{0}', space=sflag, size = 0x4, scoped, tag = 'scoped memory for tpu_custom_call.1']
    %13 = vsyncpa [#allocation3], 0
    // Predicated region
    $region2: #{tpu_custom_call.1} parent=1 // pred_check
      _
    $region3: #{tpu_custom_call.1} parent=1 // pred_check_branch
      %15 = sbr.rel (0) target = $region5
    $region4: #{tpu_custom_call.1} parent=1 // pred_region
      _
    $region5: #{tpu_custom_call.1} parent=1 // pred_fallthru
      _
    // Predicated region
    $region6: #{tpu_custom_call.1} parent=1 // pred_check
      _
    $region7: #{tpu_custom_call.1} parent=1 // pred_check_branch
      %17 = sbr.rel (0) target = $region9
    $region8: #{tpu_custom_call.1} parent=1 // pred_region
      _
    $region9: #{tpu_custom_call.1} parent=1 // pred_fallthru
      _
    // Predicated region
    $region10: #{tpu_custom_call.1} parent=1 // pred_check
      _
    $region11: #{tpu_custom_call.1} parent=1 // pred_check_branch
      %19 = sbr.rel (0) target = $region13
    $region12: #{tpu_custom_call.1} parent=1 // pred_region
      _
    $region13: #{tpu_custom_call.1} parent=1 // pred_fallthru
      _
    // Predicated region
    $region14: #{tpu_custom_call.1} parent=1 // pred_check
      _
    $region15: #{tpu_custom_call.1} parent=1 // pred_check_branch
      %21 = sbr.rel (0) target = $region17
    $region16: #{tpu_custom_call.1} parent=1 // pred_region
      _
    $region17: #{tpu_custom_call.1} parent=1 // pred_fallthru
      _
    // Predicated region
    $region18: #{tpu_custom_call.1} parent=1 // pred_check
      _
    $region19: #{tpu_custom_call.1} parent=1 // pred_check_branch
      %23 = sbr.rel (0) target = $region21
    $region20: #{tpu_custom_call.1} parent=1 // pred_region
      _
    $region21: #{tpu_custom_call.1} parent=1 // pred_fallthru
      _
    // Predicated region
    $region22: #{tpu_custom_call.1} parent=1 // pred_check
      _
    $region23: #{tpu_custom_call.1} parent=1 // pred_check_branch
      %25 = sbr.rel (0) target = $region25
    $region24: #{tpu_custom_call.1} parent=1 // pred_region
      _
    $region25: #{tpu_custom_call.1} parent=1 // pred_fallthru
      _
    %v26 = vld [vmem:[%s0] sm:$0xff]
    %v27 = vld [vmem:[%s0 + $0x8] sm:$0xff]
    %v28 = vld [vmem:[%s2] sm:$0xff]
    %v29 = vld [vmem:[%s2 + $0x8] sm:$0xff]
    %v30 = vld [vmem:[%s2 + $0x10] sm:$0xff]
    %v31 = vld [vmem:[%s2 + $0x18] sm:$0xff]
    %v32 = vld [vmem:[%s2 + $0x20] sm:$0xff]
    %v33 = vld [vmem:[%s2 + $0x28] sm:$0xff]
    %v34 = vld [vmem:[%s2 + $0x30] sm:$0xff]
    %v35 = vld [vmem:[%s2 + $0x38] sm:$0xff]
    %v36 = vld [vmem:[%s2 + $0x40] sm:$0xff]
    %v37 = vld [vmem:[%s2 + $0x48] sm:$0xff]
    %v38 = vld [vmem:[%s2 + $0x50] sm:$0xff]
    %v39 = vld [vmem:[%s2 + $0x58] sm:$0xff]
    %v40 = vld [vmem:[%s2 + $0x60] sm:$0xff]
    %v41 = vld [vmem:[%s2 + $0x68] sm:$0xff]
    %v42 = vld [vmem:[%s2 + $0x70] sm:$0xff]
    %v43 = vld [vmem:[%s2 + $0x78] sm:$0xff]
    %v44 = vld [vmem:[%s2 + $0x80] sm:$0xff]
    %v45 = vld [vmem:[%s2 + $0x88] sm:$0xff]
    %v46 = vld [vmem:[%s2 + $0x90] sm:$0xff]
    %v47 = vld [vmem:[%s2 + $0x98] sm:$0xff]
    %v48 = vld [vmem:[%s2 + $0xa0] sm:$0xff]
    %v49 = vld [vmem:[%s2 + $0xa8] sm:$0xff]
    %v50 = vld [vmem:[%s2 + $0xb0] sm:$0xff]
    %v51 = vld [vmem:[%s2 + $0xb8] sm:$0xff]
    %v52 = vld [vmem:[%s2 + $0xc0] sm:$0xff]
    %v53 = vld [vmem:[%s2 + $0xc8] sm:$0xff]
    %v54 = vld [vmem:[%s2 + $0xd0] sm:$0xff]
    %v55 = vld [vmem:[%s2 + $0xd8] sm:$0xff]
    %v56 = vld [vmem:[%s2 + $0xe0] sm:$0xff]
    %v57 = vld [vmem:[%s2 + $0xe8] sm:$0xff]
    %v58 = vld [vmem:[%s2 + $0xf0] sm:$0xff]
    %v59 = vld [vmem:[%s2 + $0xf8] sm:$0xff]
    %v60 = vld [vmem:[%s3] sm:$0x1]
    %v62 = vlaneseq
    %v63 = vshrl.u32 %v62, 7
    %v64 = vsub.s32 0, %v63
    %v65 = vrot.slane %v60, %v64
    %67 = vmatprep.subr.mxu0 0.0
    %68 = vmatpush1.msra.mxu0 %v28
    %69 = vmatprep.subr.mxu0 0.0
    %70 = vmatpush1.msra.mxu0 %v29
    %71 = vmatprep.subr.mxu0 0.0
    %72 = vmatpush1.msra.mxu0 %v30
    %73 = vmatprep.subr.mxu0 0.0
    %74 = vmatpush1.msra.mxu0 %v31
    %75 = vmatprep.subr.mxu0 0.0
    %76 = vmatpush1.msra.mxu0 %v32
    %77 = vmatprep.subr.mxu0 0.0
    %78 = vmatpush1.msra.mxu0 %v33
    %79 = vmatprep.subr.mxu0 0.0
    %80 = vmatpush1.msra.mxu0 %v34
    %81 = vmatprep.subr.mxu0 0.0
    %82 = vmatpush1.msra.mxu0 %v35
    %83 = vmatprep.subr.mxu0 0.0
    %84 = vmatpush1.msra.mxu0 %v36
    %85 = vmatprep.subr.mxu0 0.0
    %86 = vmatpush1.msra.mxu0 %v37
    %87 = vmatprep.subr.mxu0 0.0
    %88 = vmatpush1.msra.mxu0 %v38
    %89 = vmatprep.subr.mxu0 0.0
    %90 = vmatpush1.msra.mxu0 %v39
    %91 = vmatprep.subr.mxu0 0.0
    %92 = vmatpush1.msra.mxu0 %v40
    %93 = vmatprep.subr.mxu0 0.0
    %94 = vmatpush1.msra.mxu0 %v41
    %95 = vmatprep.subr.mxu0 0.0
    %96 = vmatpush1.msra.mxu0 %v42
    %97 = vmatprep.subr.mxu0 0.0
    %98 = vmatpush1.msra.mxu0 %v43
    %99 = vmatprep.subr.mxu0 0.0
    %100 = vmatpush1.msra.mxu0 %v44
    %101 = vmatprep.subr.mxu0 0.0
    %102 = vmatpush1.msra.mxu0 %v45
    %103 = vmatprep.subr.mxu0 0.0
    %104 = vmatpush1.msra.mxu0 %v46
    %105 = vmatprep.subr.mxu0 0.0
    %106 = vmatpush1.msra.mxu0 %v47
    %107 = vmatprep.subr.mxu0 0.0
    %108 = vmatpush1.msra.mxu0 %v48
    %109 = vmatprep.subr.mxu0 0.0
    %110 = vmatpush1.msra.mxu0 %v49
    %111 = vmatprep.subr.mxu0 0.0
    %112 = vmatpush1.msra.mxu0 %v50
    %113 = vmatprep.subr.mxu0 0.0
    %114 = vmatpush1.msra.mxu0 %v51
    %115 = vmatprep.subr.mxu0 0.0
    %116 = vmatpush1.msra.mxu0 %v52
    %117 = vmatprep.subr.mxu0 0.0
    %118 = vmatpush1.msra.mxu0 %v53
    %119 = vmatprep.subr.mxu0 0.0
    %120 = vmatpush1.msra.mxu0 %v54
    %121 = vmatprep.subr.mxu0 0.0
    %122 = vmatpush1.msra.mxu0 %v55
    %123 = vmatprep.subr.mxu0 0.0
    %124 = vmatpush1.msra.mxu0 %v56
    %125 = vmatprep.subr.mxu0 0.0
    %126 = vmatpush1.msra.mxu0 %v57
    %127 = vmatprep.subr.mxu0 0.0
    %128 = vmatpush1.msra.mxu0 %v58
    %129 = vmatprep.subr.mxu0 0.0
    %130 = vmatpush1.msra.mxu0 %v59
    %131 = vmatprep.mubr.f32.mxu0 %v27
    %132 = vmatmul.mubr.f32.gmra.mrb[0].mxu0 %v26
    %v133 = vpop.f32.mrb[0].mxu0
    %v134 = vadd.f32 %v65, %v133
    %v135 = vpop.f32.mrb[0].mxu0
    %136 = vdwg.mxu0
    %v137 = vld [vmem:[%s1] sm:$0xff]
    %v138 = vld [vmem:[%s1 + $0x8] sm:$0xff]
    %v139 = vld [vmem:[%s4] sm:$0xff]
    %v140 = vld [vmem:[%s4 + $0x8] sm:$0xff]
    %v141 = vld [vmem:[%s4 + $0x10] sm:$0xff]
    %v142 = vld [vmem:[%s4 + $0x18] sm:$0xff]
    %v143 = vld [vmem:[%s5] sm:$0x1]
    %v145 = vlaneseq
    %v146 = vshrl.u32 %v145, 7
    %v147 = vsub.s32 0, %v146
    %v148 = vrot.slane %v143, %v147
    %vm150 = vcmask 261120
    %v152 = vsel %vm150, %v137, 0
    %v155 = vsel %vm150, %v138, 0
    %157 = vmatprep.subr.mxu0 0.0
    %158 = vmatpush1.msra.mxu0 %v139
    %159 = vmatprep.subr.mxu0 0.0
    %160 = vmatpush1.msra.mxu0 %v140
    %161 = vmatprep.subr.mxu0 0.0
    %162 = vmatpush1.msra.mxu0 %v141
    %163 = vmatprep.subr.mxu0 0.0
    %164 = vmatpush1.msra.mxu0 %v142
    %165 = vmatprep.subr.mxu0 0.0
    %166 = vmatpush1.msra.mxu0 0.0
    %167 = vmatprep.subr.mxu0 0.0
    %168 = vmatpush1.msra.mxu0 0.0
    %169 = vmatprep.subr.mxu0 0.0
    %170 = vmatpush1.msra.mxu0 0.0
    %171 = vmatprep.subr.mxu0 0.0
    %172 = vmatpush1.msra.mxu0 0.0
    %173 = vmatprep.subr.mxu0 0.0
    %174 = vmatpush1.msra.mxu0 0.0
    %175 = vmatprep.subr.mxu0 0.0
    %176 = vmatpush1.msra.mxu0 0.0
    %177 = vmatprep.subr.mxu0 0.0
    %178 = vmatpush1.msra.mxu0 0.0
    %179 = vmatprep.subr.mxu0 0.0
    %180 = vmatpush1.msra.mxu0 0.0
    %181 = vmatprep.subr.mxu0 0.0
    %182 = vmatpush1.msra.mxu0 0.0
    %183 = vmatprep.subr.mxu0 0.0
    %184 = vmatpush1.msra.mxu0 0.0
    %185 = vmatprep.subr.mxu0 0.0
    %186 = vmatpush1.msra.mxu0 0.0
    %187 = vmatprep.subr.mxu0 0.0
    %188 = vmatpush1.msra.mxu0 0.0
    %189 = vmatprep.subr.mxu0 0.0
    %190 = vmatpush1.msra.mxu0 0.0
    %191 = vmatprep.subr.mxu0 0.0
    %192 = vmatpush1.msra.mxu0 0.0
    %193 = vmatprep.subr.mxu0 0.0
    %194 = vmatpush1.msra.mxu0 0.0
    %195 = vmatprep.subr.mxu0 0.0
    %196 = vmatpush1.msra.mxu0 0.0
    %197 = vmatprep.subr.mxu0 0.0
    %198 = vmatpush1.msra.mxu0 0.0
    %199 = vmatprep.subr.mxu0 0.0
    %200 = vmatpush1.msra.mxu0 0.0
    %201 = vmatprep.subr.mxu0 0.0
    %202 = vmatpush1.msra.mxu0 0.0
    %203 = vmatprep.subr.mxu0 0.0
    %204 = vmatpush1.msra.mxu0 0.0
    %205 = vmatprep.subr.mxu0 0.0
    %206 = vmatpush1.msra.mxu0 0.0
    %207 = vmatprep.subr.mxu0 0.0
    %208 = vmatpush1.msra.mxu0 0.0
    %209 = vmatprep.subr.mxu0 0.0
    %210 = vmatpush1.msra.mxu0 0.0
    %211 = vmatprep.subr.mxu0 0.0
    %212 = vmatpush1.msra.mxu0 0.0
    %213 = vmatprep.subr.mxu0 0.0
    %214 = vmatpush1.msra.mxu0 0.0
    %215 = vmatprep.subr.mxu0 0.0
    %216 = vmatpush1.msra.mxu0 0.0
    %217 = vmatprep.subr.mxu0 0.0
    %218 = vmatpush1.msra.mxu0 0.0
    %219 = vmatprep.subr.mxu0 0.0
    %220 = vmatpush1.msra.mxu0 0.0
    %221 = vmatprep.mubr.f32.mxu0 0.0
    %222 = vmatmul.mubr.f32.gmra.mrb[0].mxu0 %v152
    %v223 = vpop.f32.mrb[0].mxu0
    %v224 = vadd.f32 %v148, %v223
    %v225 = vpop.f32.mrb[0].mxu0
    %226 = vmatprep.mubr.f32.mxu0 0.0
    %227 = vmatmul.mubr.f32.gmra.mrb[0].mxu0 %v155
    %v228 = vpop.f32.mrb[0].mxu0
    %v229 = vadd.f32 %v148, %v228
    %v230 = vpop.f32.mrb[0].mxu0
    %231 = vdwg.mxu0
    %vm232 = vcmask 31744
    %v233 = vsel %vm232, %v224, -inf
    %234 = vmax.xlane.f32.xlu0 %v233
    %v235 = vpop.xlane.xlu0 %234
    %v236 = vsel %vm232, %v229, -inf
    %237 = vmax.xlane.f32.xlu0 %v236
    %v238 = vpop.xlane.xlu0 %237
    %v239 = vsub.f32 %v224, %v235
    %v240 = vsub.f32 %v229, %v238
    %v241 = vmul.f32 %v239, 1.442695
    %v242 = vpow.pop %v241
    %v243 = vmul.f32 %v240, 1.442695
    %v244 = vpow.pop %v243
    %v245 = vsel %vm232, %v242, 0.0
    %246 = vadd.xlane.f32.xlu0 %v245
    %v247 = vpop.xlane.xlu0 %246
    %v248 = vsel %vm232, %v244, 0.0
    %249 = vadd.xlane.f32.xlu0 %v248
    %v250 = vpop.xlane.xlu0 %249
    %v251 = vrcp.pop %v247
    %v252 = vrcp.pop %v250
    %v253 = vmul.f32 %v242, %v251
    %v254 = vmul.f32 %v244, %v252
    %255 = vst.msk [vmem:[%s6] sm:$0xff] %vm232, %v254
    %v257 = vsel %vm232, %v253, 0
    %vm259 = vcmask 1043456
    %v261 = vsel %vm259, %v134, 0
    %263 = vmatprep.subr.mxu0 0.0
    %264 = vmatpush1.msra.mxu0 %v261
    %265 = vmatprep.subr.mxu0 0.0
    %266 = vmatpush1.msra.mxu0 0.0
    %267 = vmatprep.subr.mxu0 0.0
    %268 = vmatpush1.msra.mxu0 0.0
    %269 = vmatprep.subr.mxu0 0.0
    %270 = vmatpush1.msra.mxu0 0.0
    %271 = vmatprep.subr.mxu0 0.0
    %272 = vmatpush1.msra.mxu0 0.0
    %273 = vmatprep.subr.mxu0 0.0
    %274 = vmatpush1.msra.mxu0 0.0
    %275 = vmatprep.subr.mxu0 0.0
    %276 = vmatpush1.msra.mxu0 0.0
    %277 = vmatprep.subr.mxu0 0.0
    %278 = vmatpush1.msra.mxu0 0.0
    %279 = vmatprep.subr.mxu0 0.0
    %280 = vmatpush1.msra.mxu0 0.0
    %281 = vmatprep.subr.mxu0 0.0
    %282 = vmatpush1.msra.mxu0 0.0
    %283 = vmatprep.subr.mxu0 0.0
    %284 = vmatpush1.msra.mxu0 0.0
    %285 = vmatprep.subr.mxu0 0.0
    %286 = vmatpush1.msra.mxu0 0.0
    %287 = vmatprep.subr.mxu0 0.0
    %288 = vmatpush1.msra.mxu0 0.0
    %289 = vmatprep.subr.mxu0 0.0
    %290 = vmatpush1.msra.mxu0 0.0
    %291 = vmatprep.subr.mxu0 0.0
    %292 = vmatpush1.msra.mxu0 0.0
    %293 = vmatprep.subr.mxu0 0.0
    %294 = vmatpush1.msra.mxu0 0.0
    %295 = vmatprep.subr.mxu0 0.0
    %296 = vmatpush1.msra.mxu0 0.0
    %297 = vmatprep.subr.mxu0 0.0
    %298 = vmatpush1.msra.mxu0 0.0
    %299 = vmatprep.subr.mxu0 0.0
    %300 = vmatpush1.msra.mxu0 0.0
    %301 = vmatprep.subr.mxu0 0.0
    %302 = vmatpush1.msra.mxu0 0.0
    %303 = vmatprep.subr.mxu0 0.0
    %304 = vmatpush1.msra.mxu0 0.0
    %305 = vmatprep.subr.mxu0 0.0
    %306 = vmatpush1.msra.mxu0 0.0
    %307 = vmatprep.subr.mxu0 0.0
    %308 = vmatpush1.msra.mxu0 0.0
    %309 = vmatprep.subr.mxu0 0.0
    %310 = vmatpush1.msra.mxu0 0.0
    %311 = vmatprep.subr.mxu0 0.0
    %312 = vmatpush1.msra.mxu0 0.0
    %313 = vmatprep.subr.mxu0 0.0
    %314 = vmatpush1.msra.mxu0 0.0
    %315 = vmatprep.subr.mxu0 0.0
    %316 = vmatpush1.msra.mxu0 0.0
    %317 = vmatprep.subr.mxu0 0.0
    %318 = vmatpush1.msra.mxu0 0.0
    %319 = vmatprep.subr.mxu0 0.0
    %320 = vmatpush1.msra.mxu0 0.0
    %321 = vmatprep.subr.mxu0 0.0
    %322 = vmatpush1.msra.mxu0 0.0
    %323 = vmatprep.subr.mxu0 0.0
    %324 = vmatpush1.msra.mxu0 0.0
    %325 = vmatprep.subr.mxu0 0.0
    %326 = vmatpush1.msra.mxu0 0.0
    %327 = vmatprep.mubr.f32.mxu0 0.0
    %328 = vmatmul.mubr.f32.gmra.mrb[0].mxu0 %v257
    %v329 = vpop.f32.mrb[0].mxu0
    %v330 = vadd.f32 0.0, %v329
    %v331 = vpop.f32.mrb[0].mxu0
    %332 = vdwg.mxu0
    %333 = vst.msk [vmem:[#allocation2] sm:$0xff] %vm150, %v330
    %v334 = vrot.slane %v134, 4
    %v336 = vsel %vm232, %v254, 0
    %v338 = vsel %vm259, %v334, 0
    %340 = vmatprep.subr.mxu0 0.0
    %341 = vmatpush1.msra.mxu0 %v338
    %342 = vmatprep.subr.mxu0 0.0
    %343 = vmatpush1.msra.mxu0 0.0
    %344 = vmatprep.subr.mxu0 0.0
    %345 = vmatpush1.msra.mxu0 0.0
    %346 = vmatprep.subr.mxu0 0.0
    %347 = vmatpush1.msra.mxu0 0.0
    %348 = vmatprep.subr.mxu0 0.0
    %349 = vmatpush1.msra.mxu0 0.0
    %350 = vmatprep.subr.mxu0 0.0
    %351 = vmatpush1.msra.mxu0 0.0
    %352 = vmatprep.subr.mxu0 0.0
    %353 = vmatpush1.msra.mxu0 0.0
    %354 = vmatprep.subr.mxu0 0.0
    %355 = vmatpush1.msra.mxu0 0.0
    %356 = vmatprep.subr.mxu0 0.0
    %357 = vmatpush1.msra.mxu0 0.0
    %358 = vmatprep.subr.mxu0 0.0
    %359 = vmatpush1.msra.mxu0 0.0
    %360 = vmatprep.subr.mxu0 0.0
    %361 = vmatpush1.msra.mxu0 0.0
    %362 = vmatprep.subr.mxu0 0.0
    %363 = vmatpush1.msra.mxu0 0.0
    %364 = vmatprep.subr.mxu0 0.0
    %365 = vmatpush1.msra.mxu0 0.0
    %366 = vmatprep.subr.mxu0 0.0
    %367 = vmatpush1.msra.mxu0 0.0
    %368 = vmatprep.subr.mxu0 0.0
    %369 = vmatpush1.msra.mxu0 0.0
    %370 = vmatprep.subr.mxu0 0.0
    %371 = vmatpush1.msra.mxu0 0.0
    %372 = vmatprep.subr.mxu0 0.0
    %373 = vmatpush1.msra.mxu0 0.0
    %374 = vmatprep.subr.mxu0 0.0
    %375 = vmatpush1.msra.mxu0 0.0
    %376 = vmatprep.subr.mxu0 0.0
    %377 = vmatpush1.msra.mxu0 0.0
    %378 = vmatprep.subr.mxu0 0.0
    %379 = vmatpush1.msra.mxu0 0.0
    %380 = vmatprep.subr.mxu0 0.0
    %381 = vmatpush1.msra.mxu0 0.0
    %382 = vmatprep.subr.mxu0 0.0
    %383 = vmatpush1.msra.mxu0 0.0
    %384 = vmatprep.subr.mxu0 0.0
    %385 = vmatpush1.msra.mxu0 0.0
    %386 = vmatprep.subr.mxu0 0.0
    %387 = vmatpush1.msra.mxu0 0.0
    %388 = vmatprep.subr.mxu0 0.0
    %389 = vmatpush1.msra.mxu0 0.0
    %390 = vmatprep.subr.mxu0 0.0
    %391 = vmatpush1.msra.mxu0 0.0
    %392 = vmatprep.subr.mxu0 0.0
    %393 = vmatpush1.msra.mxu0 0.0
    %394 = vmatprep.subr.mxu0 0.0
    %395 = vmatpush1.msra.mxu0 0.0
    %396 = vmatprep.subr.mxu0 0.0
    %397 = vmatpush1.msra.mxu0 0.0
    %398 = vmatprep.subr.mxu0 0.0
    %399 = vmatpush1.msra.mxu0 0.0
    %400 = vmatprep.subr.mxu0 0.0
    %401 = vmatpush1.msra.mxu0 0.0
    %402 = vmatprep.subr.mxu0 0.0
    %403 = vmatpush1.msra.mxu0 0.0
    %404 = vmatprep.mubr.f32.mxu0 0.0
    %405 = vmatmul.mubr.f32.gmra.mrb[0].mxu0 %v336
    %v406 = vpop.f32.mrb[0].mxu0
    %v407 = vadd.f32 0.0, %v406
    %v408 = vpop.f32.mrb[0].mxu0
    %409 = vdwg.mxu0
    %410 = vst.msk [vmem:[#allocation2 + $0x8] sm:$0xff] %vm150, %v407
    // Predicated region
    $region26: #{tpu_custom_call.1} parent=1 // pred_check
      _
    $region27: #{tpu_custom_call.1} parent=1 // pred_check_branch
      %412 = sbr.rel (0) target = $region29
    $region28: #{tpu_custom_call.1} parent=1 // pred_region
      _
    $region29: #{tpu_custom_call.1} parent=1 // pred_fallthru
      _
    // Predicated region
    $region30: #{tpu_custom_call.1} parent=1 // pred_check
      _
    $region31: #{tpu_custom_call.1} parent=1 // pred_check_branch
      %414 = sbr.rel (0) target = $region33
    $region32: #{tpu_custom_call.1} parent=1 // pred_region
      %s416 = ssub.s32 256, 256
      %417 = vsyncadd [#allocation3], %s416
      %s418 = sshll.u32 [#allocation2], 4
      %s419 = int_to_ptr.vmem [resolvable:$true] %s418
      %424 = dma.vmem_to_hbm [thread:$0]  %s419, 256, %s7, [#allocation3], 128, 128, 8
    $region33: #{tpu_custom_call.1} parent=1 // pred_fallthru
      _
    // Predicated region
    $region34: #{tpu_custom_call.1} parent=1 // pred_check
      _
    $region35: #{tpu_custom_call.1} parent=1 // pred_check_branch
      %426 = sbr.rel (0) target = $region37
    $region36: #{tpu_custom_call.1} parent=1 // pred_region
      _
    $region37: #{tpu_custom_call.1} parent=1 // pred_fallthru
      _
    // Predicated region
    $region38: #{tpu_custom_call.1} parent=1 // pred_check
      _
    $region39: #{tpu_custom_call.1} parent=1 // pred_check_branch
      %428 = sbr.rel (0) target = $region41
    $region40: #{tpu_custom_call.1} parent=1 // pred_region
      %429 = dma.done [#allocation3], 256
    $region41: #{tpu_custom_call.1} parent=1 // pred_fallthru
      _
    %430 = vsyncpa [#allocation3], 1

</llo_original>
